<compile_context>
chip_gen: v5e
topology: v5e:2x2
jax: 0.10.0
libtpu: 0.0.40
codegen_flags: <defaults>
</compile_context>

<pallas_src>
import functools

import jax
import jax.numpy as jnp
from jax.experimental import pallas as pl
from jax.experimental.pallas import tpu as pltpu


def _round_up(x, m):
    return ((x + m - 1) // m) * m


def _cdiv(a, b):
    return (a + b - 1) // b


def _vmem_budget_bytes():
    """Per-generation VMEM budget (bytes) with headroom for compiler scratch."""
    try:
        cap = int(pltpu.get_tpu_info().vmem_capacity_bytes)
    except Exception:  # no hw query available -> assume v7x-sized VMEM (64 MiB)
        cap = 64 * 1024 * 1024
    return max(32 * 1024 * 1024, min(cap * 3 // 4, 100 * 1024 * 1024))


def _choose_tk(K, max_tk=2048):
    """Reduction-axis tile: full K when small, else a 128-multiple divisor."""
    if K <= max_tk or K % 128 != 0:
        return K
    for tk in range(max_tk, 127, -128):
        if K % tk == 0:
            return tk
    return K


# ---------------------------------------------------------------------------
# Fused MLP kernel: o = relu(x @ w1 + b1) @ w2 + b2  for one (row-tile, K-slab).
# ---------------------------------------------------------------------------
def _mlp_kernel(x_ref, w1_ref, b1_ref, w2_ref, b2_ref, o_ref, acc_ref):
    k = pl.program_id(1)

    @pl.when(k == 0)
    def _():
        acc_ref[...] = jnp.zeros_like(acc_ref)

    # fc1 partial product for this K slab (bf16 MXU inputs, f32 accumulation).
    acc_ref[...] += jnp.dot(
        x_ref[...].astype(jnp.bfloat16), w1_ref[...],
        preferred_element_type=jnp.float32)

    @pl.when(k == pl.num_programs(1) - 1)
    def _():
        h = jnp.maximum(acc_ref[...] + b1_ref[...], 0.0)          # bias + ReLU, f32
        o = jnp.dot(h.astype(jnp.bfloat16), w2_ref[...],
                    preferred_element_type=jnp.float32)
        o_ref[...] = (o + b2_ref[...]).astype(o_ref.dtype)


def simple_nn_forward(prepared, x, *, tm=1024):
    """x: (B, ...) float32 -> (B, num_classes) float32 (PyTorch SimpleNN.forward)."""
    B = x.shape[0]
    x2 = x.reshape(B, -1)                     # x.view(x.size(0), -1)
    K = x2.shape[1]

    w1 = prepared["fc1_w_bf16"]               # (K, H)  bf16
    b1 = prepared["fc1_b_row"]                # (1, H)  f32
    w2 = prepared["fc2_w_bf16_padded"]        # (H, NP) bf16, NP = round_up(C, 128)
    b2 = prepared["fc2_b_row_padded"]         # (1, NP) f32
    n_out = prepared["num_classes"]
    H = w1.shape[1]
    NP = w2.shape[1]
    assert w1.shape[0] == K, (w1.shape, K)

    # Reduction tiling (only kicks in for large input_size).
    TK = _choose_tk(K)
    n_k = K // TK

    # Row-tile size from the VMEM budget (accounts for double-buffered x/out,
    # double-buffered resident weights, and the f32 accumulator scratch).
    budget = _vmem_budget_bytes()
    weight_bytes = 2 * (TK * H * 2) + 2 * (H * NP * 2) + 4 * 8 * max(H, NP) * 4
    per_row_bytes = 8 * TK + 8 * NP + 4 * H   # x (2x f32) + out (2x f32) + acc f32
    tm_cap = max(8, ((budget - weight_bytes) // per_row_bytes) // 8 * 8)

    tm_target = max(8, min(tm, tm_cap))
    n_tiles = _cdiv(B, tm_target)
    # v7x megacore: at least 4 row tiles (2 pipelined per TensorCore) when B permits.
    n_tiles = max(n_tiles, min(4, _cdiv(B, 8)))
    TM = min(_round_up(_cdiv(B, n_tiles), 8), tm_cap)
    n_tiles = _cdiv(B, TM)                    # ragged last tile is masked by Pallas

    cost = pl.CostEstimate(
        flops=2 * B * K * H + 2 * B * H * n_out,
        transcendentals=0,
        bytes_accessed=B * K * 4 + K * H * 2 + H * NP * 2 + B * n_out * 4,
    )

    out = pl.pallas_call(
        _mlp_kernel,
        out_shape=jax.ShapeDtypeStruct((B, NP), jnp.float32),
        grid=(n_tiles, n_k),
        in_specs=[
            pl.BlockSpec((TM, TK), lambda i, k: (i, k)),   # activations: row x K tiles
            pl.BlockSpec((TK, H), lambda i, k: (k, 0)),    # w1: K-sliced, row-resident
            pl.BlockSpec((1, H), lambda i, k: (0, 0)),     # b1: resident
            pl.BlockSpec((H, NP), lambda i, k: (0, 0)),    # w2: resident
            pl.BlockSpec((1, NP), lambda i, k: (0, 0)),    # b2: resident
        ],
        out_specs=pl.BlockSpec((TM, NP), lambda i, k: (i, 0)),
        scratch_shapes=[pltpu.VMEM((TM, H), jnp.float32)],  # fc1 accumulator
        compiler_params=pltpu.CompilerParams(
            dimension_semantics=("parallel", "arbitrary"),
            vmem_limit_bytes=budget,
        ),
        cost_estimate=cost,
    )(x2, w1, b1, w2, b2)

    return out[:, :n_out]


# ---------------------------------------------------------------------------
# Params, one-time kernel-friendly preparation, pure-JAX reference
# ---------------------------------------------------------------------------
def init_params(key, input_size, hidden_size, num_classes):
    ks = jax.random.split(key, 4)
    return {
        "fc1_w": jax.random.normal(ks[0], (input_size, hidden_size), jnp.float32) * 0.02,
        "fc1_b": jax.random.normal(ks[1], (hidden_size,), jnp.float32) * 0.01,
        "fc2_w": jax.random.normal(ks[2], (hidden_size, num_classes), jnp.float32) * 0.05,
        "fc2_b": jax.random.normal(ks[3], (num_classes,), jnp.float32) * 0.01,
    }


def prepare_params(params):
    """Cast/pad weights ONCE (outside jit) into the layout the kernel streams."""
    w1, b1 = params["fc1_w"], params["fc1_b"]
    w2, b2 = params["fc2_w"], params["fc2_b"]
    H = w1.shape[1]
    n_out = w2.shape[1]
    NP = _round_up(n_out, 128)                 # lane-dense output columns
    return {
        "fc1_w_bf16": w1.astype(jnp.bfloat16),
        "fc1_b_row": b1.reshape(1, H).astype(jnp.float32),
        "fc2_w_bf16_padded": jnp.pad(w2, ((0, 0), (0, NP - n_out))).astype(jnp.bfloat16),
        "fc2_b_row_padded": jnp.pad(b2, (0, NP - n_out)).reshape(1, NP).astype(jnp.float32),
        "num_classes": n_out,
    }


def reference_forward(params, x):
    x2 = x.reshape(x.shape[0], -1)
    h = jnp.maximum(x2 @ params["fc1_w"] + params["fc1_b"], 0.0)
    return h @ params["fc2_w"] + params["fc2_b"]


if __name__ == "__main__":
    batch, chans, hw = 2, 4, 16
    input_size = chans * hw * hw      # 1024
    hidden_size = 128
    num_classes = 10

    key = jax.random.PRNGKey(0)
    k_params, k_input = jax.random.split(key)
    params = init_params(k_params, input_size, hidden_size, num_classes)
    prepared = prepare_params(params)
    x = jax.random.normal(k_input, (batch, chans, hw, hw), jnp.float32)

    fwd = jax.jit(functools.partial(simple_nn_forward, prepared))
    out = jax.block_until_ready(fwd(x))
    assert out.shape == (batch, num_classes), out.shape

    ref = reference_forward(params, x)
    # bf16 MXU inputs (f32 accumulate) -> ~2-3 significant digits vs f32 PyTorch.
    assert jnp.allclose(out, ref, rtol=0.1, atol=0.1), float(jnp.max(jnp.abs(out - ref)))

    print("KERNEL_OK")
</pallas_src>

<mosaic_0001>
module attributes {stable_mosaic.version = 11 : i64} {
  func.func @_mlp_kernel(%arg0: i32, %arg1: i32, %arg2: memref<8x1024xf32, #tpu.memory_space<vmem>>, %arg3: memref<1024x128xbf16, #tpu.memory_space<vmem>>, %arg4: memref<1x128xf32, #tpu.memory_space<vmem>>, %arg5: memref<128x128xbf16, #tpu.memory_space<vmem>>, %arg6: memref<1x128xf32, #tpu.memory_space<vmem>>, %arg7: memref<8x128xf32, #tpu.memory_space<vmem>>, %arg8: memref<8x128xf32, #tpu.memory_space<vmem>>) attributes {dimension_semantics = [#tpu.dimension_semantics<parallel>, #tpu.dimension_semantics<arbitrary>], iteration_bounds = array<i64: 1, 1>, scalar_prefetch = 0 : i64, scratch_operands = 1 : i64, tpu.core_type = #tpu.core_type<tc>, window_params = [{transform_indices = @transform_0, window_bounds = array<i64: 8, 1024>}, {transform_indices = @transform_1, window_bounds = array<i64: 1024, 128>}, {pipeline_mode = #tpu.pipeline_mode<synchronous>, transform_indices = @transform_2, window_bounds = array<i64: 1, 128>}, {pipeline_mode = #tpu.pipeline_mode<synchronous>, transform_indices = @transform_3, window_bounds = array<i64: 128, 128>}, {pipeline_mode = #tpu.pipeline_mode<synchronous>, transform_indices = @transform_4, window_bounds = array<i64: 1, 128>}, {transform_indices = @transform_5, window_bounds = array<i64: 8, 128>}]} {
    %c0_i32 = arith.constant 0 : i32
    %0 = arith.cmpi eq, %arg1, %c0_i32 : i32
    %1 = arith.extui %0 : i1 to i32
    %c0_i32_0 = arith.constant 0 : i32
    %2 = arith.cmpi ne, %1, %c0_i32_0 : i32
    scf.if %2 {
      %cst_10 = arith.constant 0.000000e+00 : f32
      %13 = vector.broadcast %cst_10 : f32 to vector<8x128xf32>
      %c0_11 = arith.constant 0 : index
      %c0_12 = arith.constant 0 : index
      %14 = vector.load %arg8[%c0_11, %c0_12] : memref<8x128xf32, #tpu.memory_space<vmem>>, vector<8x128xf32>
      tpu.vector_store %arg8[%c0_11, %c0_12], %13 {strides = array<i32>} : memref<8x128xf32, #tpu.memory_space<vmem>>, vector<8x128xf32>,
    } else {
    }
    %c0 = arith.constant 0 : index
    %c0_1 = arith.constant 0 : index
    %3 = vector.load %arg8[%c0, %c0_1] : memref<8x128xf32, #tpu.memory_space<vmem>>, vector<8x128xf32>
    %c0_2 = arith.constant 0 : index
    %c0_3 = arith.constant 0 : index
    %4 = vector.load %arg2[%c0_2, %c0_3] : memref<8x1024xf32, #tpu.memory_space<vmem>>, vector<8x1024xf32>
    %5 = arith.truncf %4 : vector<8x1024xf32> to vector<8x1024xbf16>
    %c0_4 = arith.constant 0 : index
    %c0_5 = arith.constant 0 : index
    %6 = vector.load %arg3[%c0_4, %c0_5] : memref<1024x128xbf16, #tpu.memory_space<vmem>>, vector<1024x128xbf16>
    %cst = arith.constant dense<0.000000e+00> : vector<8x128xf32>
    %7 = tpu.matmul %5, %6, %cst {dimension_numbers = #tpu.dot_dimension_numbers<[1], [0], [0], [1], [0, 0, 1, 1], [], []>} : vector<8x1024xbf16>, vector<1024x128xbf16>, vector<8x128xf32> -> vector<8x128xf32>
    %8 = arith.addf %3, %7 : vector<8x128xf32>
    %c0_6 = arith.constant 0 : index
    %c0_7 = arith.constant 0 : index
    %9 = vector.load %arg8[%c0_6, %c0_7] : memref<8x128xf32, #tpu.memory_space<vmem>>, vector<8x128xf32>
    tpu.vector_store %arg8[%c0_6, %c0_7], %8 {strides = array<i32>} : memref<8x128xf32, #tpu.memory_space<vmem>>, vector<8x128xf32>,
    %c0_i32_8 = arith.constant 0 : i32
    %10 = arith.cmpi eq, %arg1, %c0_i32_8 : i32
    %11 = arith.extui %10 : i1 to i32
    %c0_i32_9 = arith.constant 0 : i32
    %12 = arith.cmpi ne, %11, %c0_i32_9 : i32
    scf.if %12 {
      %c0_10 = arith.constant 0 : index
      %c0_11 = arith.constant 0 : index
      %13 = vector.load %arg8[%c0_10, %c0_11] : memref<8x128xf32, #tpu.memory_space<vmem>>, vector<8x128xf32>
      %c0_12 = arith.constant 0 : index
      %c0_13 = arith.constant 0 : index
      %14 = vector.load %arg4[%c0_12, %c0_13] : memref<1x128xf32, #tpu.memory_space<vmem>>, vector<1x128xf32>
      %15 = vector.broadcast %14 : vector<1x128xf32> to vector<8x128xf32>
      %16 = arith.addf %13, %15 : vector<8x128xf32>
      %cst_14 = arith.constant 0.000000e+00 : f32
      %17 = vector.broadcast %cst_14 : f32 to vector<8x128xf32>
      %18 = arith.maximumf %16, %17 : vector<8x128xf32>
      %19 = arith.truncf %18 : vector<8x128xf32> to vector<8x128xbf16>
      %c0_15 = arith.constant 0 : index
      %c0_16 = arith.constant 0 : index
      %20 = vector.load %arg5[%c0_15, %c0_16] : memref<128x128xbf16, #tpu.memory_space<vmem>>, vector<128x128xbf16>
      %cst_17 = arith.constant dense<0.000000e+00> : vector<8x128xf32>
      %21 = tpu.matmul %19, %20, %cst_17 {dimension_numbers = #tpu.dot_dimension_numbers<[1], [0], [0], [1], [0, 0, 1, 1], [], []>} : vector<8x128xbf16>, vector<128x128xbf16>, vector<8x128xf32> -> vector<8x128xf32>
      %c0_18 = arith.constant 0 : index
      %c0_19 = arith.constant 0 : index
      %22 = vector.load %arg6[%c0_18, %c0_19] : memref<1x128xf32, #tpu.memory_space<vmem>>, vector<1x128xf32>
      %23 = vector.broadcast %22 : vector<1x128xf32> to vector<8x128xf32>
      %24 = arith.addf %21, %23 : vector<8x128xf32>
      %c0_20 = arith.constant 0 : index
      %c0_21 = arith.constant 0 : index
      %25 = vector.load %arg7[%c0_20, %c0_21] : memref<8x128xf32, #tpu.memory_space<vmem>>, vector<8x128xf32>
      tpu.vector_store %arg7[%c0_20, %c0_21], %24 {strides = array<i32>} : memref<8x128xf32, #tpu.memory_space<vmem>>, vector<8x128xf32>,
    } else {
    }
    return
  }
  func.func @transform_0(%arg0: i32, %arg1: i32) -> (i32, i32) {
    %c0_i32 = arith.constant 0 : i32
    return %arg0, %arg1 : i32, i32
  }
  func.func @transform_1(%arg0: i32, %arg1: i32) -> (i32, i32) {
    %c0_i32 = arith.constant 0 : i32
    %c0_i32_0 = arith.constant 0 : i32
    return %arg1, %c0_i32 : i32, i32
  }
  func.func @transform_2(%arg0: i32, %arg1: i32) -> (i32, i32) {
    %c0_i32 = arith.constant 0 : i32
    %c0_i32_0 = arith.constant 0 : i32
    %c0_i32_1 = arith.constant 0 : i32
    return %c0_i32, %c0_i32_0 : i32, i32
  }
  func.func @transform_3(%arg0: i32, %arg1: i32) -> (i32, i32) {
    %c0_i32 = arith.constant 0 : i32
    %c0_i32_0 = arith.constant 0 : i32
    %c0_i32_1 = arith.constant 0 : i32
    return %c0_i32, %c0_i32_0 : i32, i32
  }
  func.func @transform_4(%arg0: i32, %arg1: i32) -> (i32, i32) {
    %c0_i32 = arith.constant 0 : i32
    %c0_i32_0 = arith.constant 0 : i32
    %c0_i32_1 = arith.constant 0 : i32
    return %c0_i32, %c0_i32_0 : i32, i32
  }
  func.func @transform_5(%arg0: i32, %arg1: i32) -> (i32, i32) {
    %c0_i32 = arith.constant 0 : i32
    %c0_i32_0 = arith.constant 0 : i32
    return %arg0, %c0_i32 : i32, i32
  }
}

</mosaic_0001>

<llo_original>
// kernel: simple_nn_forward.1
$region0: #{simple_nn_forward.1}
  #allocation0 [shape = 'u32[]', space=smem, size = 0x4, offset = 0x4, fixed_abs, tag = 'smem constant byte address 0x4 - core index']
  #allocation1 [shape = 'u32[72,128]{1,0:T(1,128)}', space=vmem, size = 0x9000, scoped, tag = 'internal scratch']
  #allocation2 [shape = 'f32[8,128]{1,0:T(8,128)}', space=vmem, size = 0x1000, scoped, tag = 'scratch operand']
  %s0 = inlined_call_operand.vmem [shape: f32[2,1024], index: 0, kind: input, shape index: {}]
  %s1 = inlined_call_operand.hbm [shape: bf16[1024,128], index: 1, kind: input, shape index: {}]
  %s2 = inlined_call_operand.vmem [shape: f32[1,128], index: 2, kind: input, shape index: {}]
  %s3 = inlined_call_operand.vmem [shape: bf16[128,128], index: 3, kind: input, shape index: {}]
  %s4 = inlined_call_operand.vmem [shape: f32[1,128], index: 4, kind: input, shape index: {}]
  %s5 = inlined_call_operand.hbm [shape: f32[2,128], index: 5, kind: output, shape index: {}]
  %s6 = sld [smem:[#allocation0]]
  $region42: #{simple_nn_forward.1} parent=0
    _
  %s8 = ssub.s32 1, %s6
  %s9 = scalar_select 0, %s8, %s6
  $region1: #{simple_nn_forward.1} parent=0
    #allocation3 [shape = 'u8[262144]{0}', space=vmem, size = 0x40000, scoped, tag = 'input window, operand 1, single buffered']
    #allocation4 [shape = 's32[1]{0}', space=sflag, size = 0x4, scoped, tag = 'scoped memory for simple_nn_forward.1']
    #allocation5 [shape = 's32[1]{0}', space=sflag, size = 0x4, scoped, tag = 'scoped memory for simple_nn_forward.1']
    #allocation6 [shape = 'u8[4096]{0}', space=vmem, size = 0x1000, scoped, tag = 'output window, operand 0, single buffered']
    %10 = vsyncpa [#allocation4], 0
    %11 = vsyncpa [#allocation5], 0
    // Predicated region
    $region2: #{simple_nn_forward.1} parent=1 // pred_check
      _
    $region3: #{simple_nn_forward.1} parent=1 // pred_check_branch
      %13 = sbr.rel (0) target = $region5
    $region4: #{simple_nn_forward.1} parent=1 // pred_region
      _
    $region5: #{simple_nn_forward.1} parent=1 // pred_fallthru
      _
    // Predicated region
    $region6: #{simple_nn_forward.1} parent=1 // pred_check
      _
    $region7: #{simple_nn_forward.1} parent=1 // pred_check_branch
      %15 = sbr.rel (0) target = $region9
    $region8: #{simple_nn_forward.1} parent=1 // pred_region
      %17 = vsyncadd [#allocation4], 0
      %s18 = sshll.u32 %s1, 4
      %s19 = int_to_ptr.hbm [resolvable:$true] %s18
      %s20 = sshll.u32 [#allocation3], 4
      %s21 = int_to_ptr.vmem [resolvable:$true] %s20
      %26 = dma.hbm_to_vmem [thread:$0]  %s19, 8192, %s21, [#allocation4], 64, 64, 4
    $region9: #{simple_nn_forward.1} parent=1 // pred_fallthru
      _
    // Predicated region
    $region10: #{simple_nn_forward.1} parent=1 // pred_check
      _
    $region11: #{simple_nn_forward.1} parent=1 // pred_check_branch
      %28 = sbr.rel (0) target = $region13
    $region12: #{simple_nn_forward.1} parent=1 // pred_region
      _
    $region13: #{simple_nn_forward.1} parent=1 // pred_fallthru
      _
    // Predicated region
    $region14: #{simple_nn_forward.1} parent=1 // pred_check
      _
    $region15: #{simple_nn_forward.1} parent=1 // pred_check_branch
      %30 = sbr.rel (0) target = $region17
    $region16: #{simple_nn_forward.1} parent=1 // pred_region
      _
    $region17: #{simple_nn_forward.1} parent=1 // pred_fallthru
      _
    // Predicated region
    $region18: #{simple_nn_forward.1} parent=1 // pred_check
      _
    $region19: #{simple_nn_forward.1} parent=1 // pred_check_branch
      %32 = sbr.rel (0) target = $region21
    $region20: #{simple_nn_forward.1} parent=1 // pred_region
      _
    $region21: #{simple_nn_forward.1} parent=1 // pred_fallthru
      _
    // Predicated region
    $region22: #{simple_nn_forward.1} parent=1 // pred_check
      _
    $region23: #{simple_nn_forward.1} parent=1 // pred_check_branch
      %34 = sbr.rel (0) target = $region25
    $region24: #{simple_nn_forward.1} parent=1 // pred_region
      %36 = dma.done [#allocation4], 8192
    $region25: #{simple_nn_forward.1} parent=1 // pred_fallthru
      _
    %p37 = scmp.eq.s32.totalorder 0, 0
    // Predicated region
    $region26: #{simple_nn_forward.1} parent=1 // pred_check
      %p38 = pneg %p37
    $region27: #{simple_nn_forward.1} parent=1 // pred_check_branch
      %40 = sbr.rel (%p38) target = $region29
    $region28: #{simple_nn_forward.1} parent=1 // pred_region
      %41 = vst [vmem:[#allocation2] sm:$0xff] 0.0
    $region29: #{simple_nn_forward.1} parent=1 // pred_fallthru
      _
    %v42 = vld [vmem:[#allocation2] sm:$0xff]
    %v43 = vld [vmem:[%s0] sm:$0xff]
    %v44 = vld [vmem:[%s0 + $0x8] sm:$0xff]
    %v45 = vld [vmem:[%s0 + $0x10] sm:$0xff]
    %v46 = vld [vmem:[%s0 + $0x18] sm:$0xff]
    %v47 = vld [vmem:[%s0 + $0x20] sm:$0xff]
    %v48 = vld [vmem:[%s0 + $0x28] sm:$0xff]
    %v49 = vld [vmem:[%s0 + $0x30] sm:$0xff]
    %v50 = vld [vmem:[%s0 + $0x38] sm:$0xff]
    %59 = vst [vmem:[#allocation1] ss:$4 sm:$0xff] %v43
    %s60 = scalar_lea.vmem [#allocation1], 1
    %61 = vst [vmem:[%s60] ss:$4 sm:$0xff] %v45
    %s62 = scalar_lea.vmem [#allocation1], 2
    %63 = vst [vmem:[%s62] ss:$4 sm:$0xff] %v47
    %s64 = scalar_lea.vmem [#allocation1], 3
    %65 = vst [vmem:[%s64] ss:$4 sm:$0xff] %v49
    %s66 = scalar_lea.vmem [#allocation1], 32
    %67 = vst [vmem:[%s66] ss:$4 sm:$0xff] %v44
    %s68 = scalar_lea.vmem [#allocation1], 33
    %69 = vst [vmem:[%s68] ss:$4 sm:$0xff] %v46
    %s70 = scalar_lea.vmem [#allocation1], 34
    %71 = vst [vmem:[%s70] ss:$4 sm:$0xff] %v48
    %s72 = scalar_lea.vmem [#allocation1], 35
    %73 = vst [vmem:[%s72] ss:$4 sm:$0xff] %v50
    %v74 = vld.sshfl [vmem:[#allocation1] sm:$0xff pattern:$0x73625140]
    %v75 = vld.sshfl [vmem:[#allocation1 + $0x8] sm:$0xff pattern:$0x73625140]
    %v76 = vld.sshfl [vmem:[#allocation1 + $0x10] sm:$0xff pattern:$0x73625140]
    %v77 = vld.sshfl [vmem:[#allocation1 + $0x18] sm:$0xff pattern:$0x73625140]
    %v78 = vld.sshfl [vmem:[#allocation1 + $0x20] sm:$0xff pattern:$0x73625140]
    %v79 = vld.sshfl [vmem:[#allocation1 + $0x28] sm:$0xff pattern:$0x73625140]
    %v80 = vld.sshfl [vmem:[#allocation1 + $0x30] sm:$0xff pattern:$0x73625140]
    %v81 = vld.sshfl [vmem:[#allocation1 + $0x38] sm:$0xff pattern:$0x73625140]
    %v90 = vpack.c.bf16 %v74, %v74
    %v91 = vpack.c.bf16 %v75, %v75
    %v92 = vpack.c.bf16 %v76, %v76
    %v93 = vpack.c.bf16 %v77, %v77
    %v94 = vpack.c.bf16 %v78, %v78
    %v95 = vpack.c.bf16 %v79, %v79
    %v96 = vpack.c.bf16 %v80, %v80
    %v97 = vpack.c.bf16 %v81, %v81
    %v98 = vld [vmem:[#allocation3] sm:$0xf]
    %v99 = vld [vmem:[#allocation3 + $0x4] sm:$0xf]
    %v100 = vld [vmem:[#allocation3 + $0x8] sm:$0xf]
    %v101 = vld [vmem:[#allocation3 + $0xc] sm:$0xf]
    %v102 = vld [vmem:[#allocation3 + $0x10] sm:$0xf]
    %v103 = vld [vmem:[#allocation3 + $0x14] sm:$0xf]
    %v104 = vld [vmem:[#allocation3 + $0x18] sm:$0xf]
    %v105 = vld [vmem:[#allocation3 + $0x1c] sm:$0xf]
    %v106 = vld [vmem:[#allocation3 + $0x20] sm:$0xf]
    %v107 = vld [vmem:[#allocation3 + $0x24] sm:$0xf]
    %v108 = vld [vmem:[#allocation3 + $0x28] sm:$0xf]
    %v109 = vld [vmem:[#allocation3 + $0x2c] sm:$0xf]
    %v110 = vld [vmem:[#allocation3 + $0x30] sm:$0xf]
    %v111 = vld [vmem:[#allocation3 + $0x34] sm:$0xf]
    %v112 = vld [vmem:[#allocation3 + $0x38] sm:$0xf]
    %v113 = vld [vmem:[#allocation3 + $0x3c] sm:$0xf]
    %v114 = vld [vmem:[#allocation3 + $0x40] sm:$0xf]
    %v115 = vld [vmem:[#allocation3 + $0x44] sm:$0xf]
    %v116 = vld [vmem:[#allocation3 + $0x48] sm:$0xf]
    %v117 = vld [vmem:[#allocation3 + $0x4c] sm:$0xf]
    %v118 = vld [vmem:[#allocation3 + $0x50] sm:$0xf]
    %v119 = vld [vmem:[#allocation3 + $0x54] sm:$0xf]
    %v120 = vld [vmem:[#allocation3 + $0x58] sm:$0xf]
    %v121 = vld [vmem:[#allocation3 + $0x5c] sm:$0xf]
    %v122 = vld [vmem:[#allocation3 + $0x60] sm:$0xf]
    %v123 = vld [vmem:[#allocation3 + $0x64] sm:$0xf]
    %v124 = vld [vmem:[#allocation3 + $0x68] sm:$0xf]
    %v125 = vld [vmem:[#allocation3 + $0x6c] sm:$0xf]
    %v126 = vld [vmem:[#allocation3 + $0x70] sm:$0xf]
    %v127 = vld [vmem:[#allocation3 + $0x74] sm:$0xf]
    %v128 = vld [vmem:[#allocation3 + $0x78] sm:$0xf]
    %v129 = vld [vmem:[#allocation3 + $0x7c] sm:$0xf]
    %v130 = vld [vmem:[#allocation3 + $0x80] sm:$0xf]
    %v131 = vld [vmem:[#allocation3 + $0x84] sm:$0xf]
    %v132 = vld [vmem:[#allocation3 + $0x88] sm:$0xf]
    %v133 = vld [vmem:[#allocation3 + $0x8c] sm:$0xf]
    %v134 = vld [vmem:[#allocation3 + $0x90] sm:$0xf]
    %v135 = vld [vmem:[#allocation3 + $0x94] sm:$0xf]
    %v136 = vld [vmem:[#allocation3 + $0x98] sm:$0xf]
    %v137 = vld [vmem:[#allocation3 + $0x9c] sm:$0xf]
    %v138 = vld [vmem:[#allocation3 + $0xa0] sm:$0xf]
    %v139 = vld [vmem:[#allocation3 + $0xa4] sm:$0xf]
    %v140 = vld [vmem:[#allocation3 + $0xa8] sm:$0xf]
    %v141 = vld [vmem:[#allocation3 + $0xac] sm:$0xf]
    %v142 = vld [vmem:[#allocation3 + $0xb0] sm:$0xf]
    %v143 = vld [vmem:[#allocation3 + $0xb4] sm:$0xf]
    %v144 = vld [vmem:[#allocation3 + $0xb8] sm:$0xf]
    %v145 = vld [vmem:[#allocation3 + $0xbc] sm:$0xf]
    %v146 = vld [vmem:[#allocation3 + $0xc0] sm:$0xf]
    %v147 = vld [vmem:[#allocation3 + $0xc4] sm:$0xf]
    %v148 = vld [vmem:[#allocation3 + $0xc8] sm:$0xf]
    %v149 = vld [vmem:[#allocation3 + $0xcc] sm:$0xf]
    %v150 = vld [vmem:[#allocation3 + $0xd0] sm:$0xf]
    %v151 = vld [vmem:[#allocation3 + $0xd4] sm:$0xf]
    %v152 = vld [vmem:[#allocation3 + $0xd8] sm:$0xf]
    %v153 = vld [vmem:[#allocation3 + $0xdc] sm:$0xf]
    %v154 = vld [vmem:[#allocation3 + $0xe0] sm:$0xf]
    %v155 = vld [vmem:[#allocation3 + $0xe4] sm:$0xf]
    %v156 = vld [vmem:[#allocation3 + $0xe8] sm:$0xf]
    %v157 = vld [vmem:[#allocation3 + $0xec] sm:$0xf]
    %v158 = vld [vmem:[#allocation3 + $0xf0] sm:$0xf]
    %v159 = vld [vmem:[#allocation3 + $0xf4] sm:$0xf]
    %v160 = vld [vmem:[#allocation3 + $0xf8] sm:$0xf]
    %v161 = vld [vmem:[#allocation3 + $0xfc] sm:$0xf]
    %v162 = vld [vmem:[#allocation3 + $0x100] sm:$0xf]
    %v163 = vld [vmem:[#allocation3 + $0x104] sm:$0xf]
    %v164 = vld [vmem:[#allocation3 + $0x108] sm:$0xf]
    %v165 = vld [vmem:[#allocation3 + $0x10c] sm:$0xf]
    %v166 = vld [vmem:[#allocation3 + $0x110] sm:$0xf]
    %v167 = vld [vmem:[#allocation3 + $0x114] sm:$0xf]
    %v168 = vld [vmem:[#allocation3 + $0x118] sm:$0xf]
    %v169 = vld [vmem:[#allocation3 + $0x11c] sm:$0xf]
    %v170 = vld [vmem:[#allocation3 + $0x120] sm:$0xf]
    %v171 = vld [vmem:[#allocation3 + $0x124] sm:$0xf]
    %v172 = vld [vmem:[#allocation3 + $0x128] sm:$0xf]
    %v173 = vld [vmem:[#allocation3 + $0x12c] sm:$0xf]
    %v174 = vld [vmem:[#allocation3 + $0x130] sm:$0xf]
    %v175 = vld [vmem:[#allocation3 + $0x134] sm:$0xf]
    %v176 = vld [vmem:[#allocation3 + $0x138] sm:$0xf]
    %v177 = vld [vmem:[#allocation3 + $0x13c] sm:$0xf]
    %v178 = vld [vmem:[#allocation3 + $0x140] sm:$0xf]
    %v179 = vld [vmem:[#allocation3 + $0x144] sm:$0xf]
    %v180 = vld [vmem:[#allocation3 + $0x148] sm:$0xf]
    %v181 = vld [vmem:[#allocation3 + $0x14c] sm:$0xf]
    %v182 = vld [vmem:[#allocation3 + $0x150] sm:$0xf]
    %v183 = vld [vmem:[#allocation3 + $0x154] sm:$0xf]
    %v184 = vld [vmem:[#allocation3 + $0x158] sm:$0xf]
    %v185 = vld [vmem:[#allocation3 + $0x15c] sm:$0xf]
    %v186 = vld [vmem:[#allocation3 + $0x160] sm:$0xf]
    %v187 = vld [vmem:[#allocation3 + $0x164] sm:$0xf]
    %v188 = vld [vmem:[#allocation3 + $0x168] sm:$0xf]
    %v189 = vld [vmem:[#allocation3 + $0x16c] sm:$0xf]
    %v190 = vld [vmem:[#allocation3 + $0x170] sm:$0xf]
    %v191 = vld [vmem:[#allocation3 + $0x174] sm:$0xf]
    %v192 = vld [vmem:[#allocation3 + $0x178] sm:$0xf]
    %v193 = vld [vmem:[#allocation3 + $0x17c] sm:$0xf]
    %v194 = vld [vmem:[#allocation3 + $0x180] sm:$0xf]
    %v195 = vld [vmem:[#allocation3 + $0x184] sm:$0xf]
    %v196 = vld [vmem:[#allocation3 + $0x188] sm:$0xf]
    %v197 = vld [vmem:[#allocation3 + $0x18c] sm:$0xf]
    %v198 = vld [vmem:[#allocation3 + $0x190] sm:$0xf]
    %v199 = vld [vmem:[#allocation3 + $0x194] sm:$0xf]
    %v200 = vld [vmem:[#allocation3 + $0x198] sm:$0xf]
    %v201 = vld [vmem:[#allocation3 + $0x19c] sm:$0xf]
    %v202 = vld [vmem:[#allocation3 + $0x1a0] sm:$0xf]
    %v203 = vld [vmem:[#allocation3 + $0x1a4] sm:$0xf]
    %v204 = vld [vmem:[#allocation3 + $0x1a8] sm:$0xf]
    %v205 = vld [vmem:[#allocation3 + $0x1ac] sm:$0xf]
    %v206 = vld [vmem:[#allocation3 + $0x1b0] sm:$0xf]
    %v207 = vld [vmem:[#allocation3 + $0x1b4] sm:$0xf]
    %v208 = vld [vmem:[#allocation3 + $0x1b8] sm:$0xf]
    %v209 = vld [vmem:[#allocation3 + $0x1bc] sm:$0xf]
    %v210 = vld [vmem:[#allocation3 + $0x1c0] sm:$0xf]
    %v211 = vld [vmem:[#allocation3 + $0x1c4] sm:$0xf]
    %v212 = vld [vmem:[#allocation3 + $0x1c8] sm:$0xf]
    %v213 = vld [vmem:[#allocation3 + $0x1cc] sm:$0xf]
    %v214 = vld [vmem:[#allocation3 + $0x1d0] sm:$0xf]
    %v215 = vld [vmem:[#allocation3 + $0x1d4] sm:$0xf]
    %v216 = vld [vmem:[#allocation3 + $0x1d8] sm:$0xf]
    %v217 = vld [vmem:[#allocation3 + $0x1dc] sm:$0xf]
    %v218 = vld [vmem:[#allocation3 + $0x1e0] sm:$0xf]
    %v219 = vld [vmem:[#allocation3 + $0x1e4] sm:$0xf]
    %v220 = vld [vmem:[#allocation3 + $0x1e8] sm:$0xf]
    %v221 = vld [vmem:[#allocation3 + $0x1ec] sm:$0xf]
    %v222 = vld [vmem:[#allocation3 + $0x1f0] sm:$0xf]
    %v223 = vld [vmem:[#allocation3 + $0x1f4] sm:$0xf]
    %v224 = vld [vmem:[#allocation3 + $0x1f8] sm:$0xf]
    %v225 = vld [vmem:[#allocation3 + $0x1fc] sm:$0xf]
    %v354 = vunpack.c.l.b16 %v98
    %v355 = vunpack.c.l.b16 %v99
    %v356 = vunpack.c.l.b16 %v100
    %v357 = vunpack.c.l.b16 %v101
    %v358 = vunpack.c.l.b16 %v102
    %v359 = vunpack.c.l.b16 %v103
    %v360 = vunpack.c.l.b16 %v104
    %v361 = vunpack.c.l.b16 %v105
    %v362 = vunpack.c.l.b16 %v106
    %v363 = vunpack.c.l.b16 %v107
    %v364 = vunpack.c.l.b16 %v108
    %v365 = vunpack.c.l.b16 %v109
    %v366 = vunpack.c.l.b16 %v110
    %v367 = vunpack.c.l.b16 %v111
    %v368 = vunpack.c.l.b16 %v112
    %v369 = vunpack.c.l.b16 %v113
    %v370 = vunpack.c.l.b16 %v114
    %v371 = vunpack.c.l.b16 %v115
    %v372 = vunpack.c.l.b16 %v116
    %v373 = vunpack.c.l.b16 %v117
    %v374 = vunpack.c.l.b16 %v118
    %v375 = vunpack.c.l.b16 %v119
    %v376 = vunpack.c.l.b16 %v120
    %v377 = vunpack.c.l.b16 %v121
    %v378 = vunpack.c.l.b16 %v122
    %v379 = vunpack.c.l.b16 %v123
    %v380 = vunpack.c.l.b16 %v124
    %v381 = vunpack.c.l.b16 %v125
    %v382 = vunpack.c.l.b16 %v126
    %v383 = vunpack.c.l.b16 %v127
    %v384 = vunpack.c.l.b16 %v128
    %v385 = vunpack.c.l.b16 %v129
    %v386 = vunpack.c.l.b16 %v130
    %v387 = vunpack.c.l.b16 %v131
    %v388 = vunpack.c.l.b16 %v132
    %v389 = vunpack.c.l.b16 %v133
    %v390 = vunpack.c.l.b16 %v134
    %v391 = vunpack.c.l.b16 %v135
    %v392 = vunpack.c.l.b16 %v136
    %v393 = vunpack.c.l.b16 %v137
    %v394 = vunpack.c.l.b16 %v138
    %v395 = vunpack.c.l.b16 %v139
    %v396 = vunpack.c.l.b16 %v140
    %v397 = vunpack.c.l.b16 %v141
    %v398 = vunpack.c.l.b16 %v142
    %v399 = vunpack.c.l.b16 %v143
    %v400 = vunpack.c.l.b16 %v144
    %v401 = vunpack.c.l.b16 %v145
    %v402 = vunpack.c.l.b16 %v146
    %v403 = vunpack.c.l.b16 %v147
    %v404 = vunpack.c.l.b16 %v148
    %v405 = vunpack.c.l.b16 %v149
    %v406 = vunpack.c.l.b16 %v150
    %v407 = vunpack.c.l.b16 %v151
    %v408 = vunpack.c.l.b16 %v152
    %v409 = vunpack.c.l.b16 %v153
    %v410 = vunpack.c.l.b16 %v154
    %v411 = vunpack.c.l.b16 %v155
    %v412 = vunpack.c.l.b16 %v156
    %v413 = vunpack.c.l.b16 %v157
    %v414 = vunpack.c.l.b16 %v158
    %v415 = vunpack.c.l.b16 %v159
    %v416 = vunpack.c.l.b16 %v160
    %v417 = vunpack.c.l.b16 %v161
    %v418 = vunpack.c.l.b16 %v162
    %v419 = vunpack.c.l.b16 %v163
    %v420 = vunpack.c.l.b16 %v164
    %v421 = vunpack.c.l.b16 %v165
    %v422 = vunpack.c.l.b16 %v166
    %v423 = vunpack.c.l.b16 %v167
    %v424 = vunpack.c.l.b16 %v168
    %v425 = vunpack.c.l.b16 %v169
    %v426 = vunpack.c.l.b16 %v170
    %v427 = vunpack.c.l.b16 %v171
    %v428 = vunpack.c.l.b16 %v172
    %v429 = vunpack.c.l.b16 %v173
    %v430 = vunpack.c.l.b16 %v174
    %v431 = vunpack.c.l.b16 %v175
    %v432 = vunpack.c.l.b16 %v176
    %v433 = vunpack.c.l.b16 %v177
    %v434 = vunpack.c.l.b16 %v178
    %v435 = vunpack.c.l.b16 %v179
    %v436 = vunpack.c.l.b16 %v180
    %v437 = vunpack.c.l.b16 %v181
    %v438 = vunpack.c.l.b16 %v182
    %v439 = vunpack.c.l.b16 %v183
    %v440 = vunpack.c.l.b16 %v184
    %v441 = vunpack.c.l.b16 %v185
    %v442 = vunpack.c.l.b16 %v186
    %v443 = vunpack.c.l.b16 %v187
    %v444 = vunpack.c.l.b16 %v188
    %v445 = vunpack.c.l.b16 %v189
    %v446 = vunpack.c.l.b16 %v190
    %v447 = vunpack.c.l.b16 %v191
    %v448 = vunpack.c.l.b16 %v192
    %v449 = vunpack.c.l.b16 %v193
    %v450 = vunpack.c.l.b16 %v194
    %v451 = vunpack.c.l.b16 %v195
    %v452 = vunpack.c.l.b16 %v196
    %v453 = vunpack.c.l.b16 %v197
    %v454 = vunpack.c.l.b16 %v198
    %v455 = vunpack.c.l.b16 %v199
    %v456 = vunpack.c.l.b16 %v200
    %v457 = vunpack.c.l.b16 %v201
    %v458 = vunpack.c.l.b16 %v202
    %v459 = vunpack.c.l.b16 %v203
    %v460 = vunpack.c.l.b16 %v204
    %v461 = vunpack.c.l.b16 %v205
    %v462 = vunpack.c.l.b16 %v206
    %v463 = vunpack.c.l.b16 %v207
    %v464 = vunpack.c.l.b16 %v208
    %v465 = vunpack.c.l.b16 %v209
    %v466 = vunpack.c.l.b16 %v210
    %v467 = vunpack.c.l.b16 %v211
    %v468 = vunpack.c.l.b16 %v212
    %v469 = vunpack.c.l.b16 %v213
    %v470 = vunpack.c.l.b16 %v214
    %v471 = vunpack.c.l.b16 %v215
    %v472 = vunpack.c.l.b16 %v216
    %v473 = vunpack.c.l.b16 %v217
    %v474 = vunpack.c.l.b16 %v218
    %v475 = vunpack.c.l.b16 %v219
    %v476 = vunpack.c.l.b16 %v220
    %v477 = vunpack.c.l.b16 %v221
    %v478 = vunpack.c.l.b16 %v222
    %v479 = vunpack.c.l.b16 %v223
    %v480 = vunpack.c.l.b16 %v224
    %v481 = vunpack.c.l.b16 %v225
    %v482 = vpack.c.b16 %v355, %v354
    %v483 = vpack.c.b16 %v357, %v356
    %v484 = vpack.c.b16 %v359, %v358
    %v485 = vpack.c.b16 %v361, %v360
    %v486 = vpack.c.b16 %v363, %v362
    %v487 = vpack.c.b16 %v365, %v364
    %v488 = vpack.c.b16 %v367, %v366
    %v489 = vpack.c.b16 %v369, %v368
    %v490 = vpack.c.b16 %v371, %v370
    %v491 = vpack.c.b16 %v373, %v372
    %v492 = vpack.c.b16 %v375, %v374
    %v493 = vpack.c.b16 %v377, %v376
    %v494 = vpack.c.b16 %v379, %v378
    %v495 = vpack.c.b16 %v381, %v380
    %v496 = vpack.c.b16 %v383, %v382
    %v497 = vpack.c.b16 %v385, %v384
    %v498 = vpack.c.b16 %v387, %v386
    %v499 = vpack.c.b16 %v389, %v388
    %v500 = vpack.c.b16 %v391, %v390
    %v501 = vpack.c.b16 %v393, %v392
    %v502 = vpack.c.b16 %v395, %v394
    %v503 = vpack.c.b16 %v397, %v396
    %v504 = vpack.c.b16 %v399, %v398
    %v505 = vpack.c.b16 %v401, %v400
    %v506 = vpack.c.b16 %v403, %v402
    %v507 = vpack.c.b16 %v405, %v404
    %v508 = vpack.c.b16 %v407, %v406
    %v509 = vpack.c.b16 %v409, %v408
    %v510 = vpack.c.b16 %v411, %v410
    %v511 = vpack.c.b16 %v413, %v412
    %v512 = vpack.c.b16 %v415, %v414
    %v513 = vpack.c.b16 %v417, %v416
    %v514 = vpack.c.b16 %v419, %v418
    %v515 = vpack.c.b16 %v421, %v420
    %v516 = vpack.c.b16 %v423, %v422
    %v517 = vpack.c.b16 %v425, %v424
    %v518 = vpack.c.b16 %v427, %v426
    %v519 = vpack.c.b16 %v429, %v428
    %v520 = vpack.c.b16 %v431, %v430
    %v521 = vpack.c.b16 %v433, %v432
    %v522 = vpack.c.b16 %v435, %v434
    %v523 = vpack.c.b16 %v437, %v436
    %v524 = vpack.c.b16 %v439, %v438
    %v525 = vpack.c.b16 %v441, %v440
    %v526 = vpack.c.b16 %v443, %v442
    %v527 = vpack.c.b16 %v445, %v444
    %v528 = vpack.c.b16 %v447, %v446
    %v529 = vpack.c.b16 %v449, %v448
    %v530 = vpack.c.b16 %v451, %v450
    %v531 = vpack.c.b16 %v453, %v452
    %v532 = vpack.c.b16 %v455, %v454
    %v533 = vpack.c.b16 %v457, %v456
    %v534 = vpack.c.b16 %v459, %v458
    %v535 = vpack.c.b16 %v461, %v460
    %v536 = vpack.c.b16 %v463, %v462
    %v537 = vpack.c.b16 %v465, %v464
    %v538 = vpack.c.b16 %v467, %v466
    %v539 = vpack.c.b16 %v469, %v468
    %v540 = vpack.c.b16 %v471, %v470
    %v541 = vpack.c.b16 %v473, %v472
    %v542 = vpack.c.b16 %v475, %v474
    %v543 = vpack.c.b16 %v477, %v476
    %v544 = vpack.c.b16 %v479, %v478
    %v545 = vpack.c.b16 %v481, %v480
    %610 = vmatpush.bf16.msra.mxu0 %v489
    %611 = vmatpush.bf16.msra.mxu0 %v488
    %612 = vmatpush.bf16.msra.mxu0 %v487
    %613 = vmatpush.bf16.msra.mxu0 %v486
    %614 = vmatpush.bf16.msra.mxu0 %v485
    %615 = vmatpush.bf16.msra.mxu0 %v484
    %616 = vmatpush.bf16.msra.mxu0 %v483
    %617 = vmatpush.bf16.msra.mxu0 %v482
    %618 = vmatmul.bf16.gmra.mxu0 %v90
    %v619 = vpop.f32.mrf.mxu0
    %v620 = vadd.f32 0.0, %v619
    %v621 = vpop.f32.mrf.mxu0
    %622 = vdwg.mxu0
    %623 = vmatpush.bf16.msra.mxu0 %v497
    %624 = vmatpush.bf16.msra.mxu0 %v496
    %625 = vmatpush.bf16.msra.mxu0 %v495
    %626 = vmatpush.bf16.msra.mxu0 %v494
    %627 = vmatpush.bf16.msra.mxu0 %v493
    %628 = vmatpush.bf16.msra.mxu0 %v492
    %629 = vmatpush.bf16.msra.mxu0 %v491
    %630 = vmatpush.bf16.msra.mxu0 %v490
    %631 = vmatmul.bf16.gmra.mxu0 %v91
    %v632 = vpop.f32.mrf.mxu0
    %v633 = vadd.f32 %v620, %v632
    %v634 = vpop.f32.mrf.mxu0
    %635 = vdwg.mxu0
    %636 = vmatpush.bf16.msra.mxu0 %v505
    %637 = vmatpush.bf16.msra.mxu0 %v504
    %638 = vmatpush.bf16.msra.mxu0 %v503
    %639 = vmatpush.bf16.msra.mxu0 %v502
    %640 = vmatpush.bf16.msra.mxu0 %v501
    %641 = vmatpush.bf16.msra.mxu0 %v500
    %642 = vmatpush.bf16.msra.mxu0 %v499
    %643 = vmatpush.bf16.msra.mxu0 %v498
    %644 = vmatmul.bf16.gmra.mxu0 %v92
    %v645 = vpop.f32.mrf.mxu0
    %v646 = vadd.f32 %v633, %v645
    %v647 = vpop.f32.mrf.mxu0
    %648 = vdwg.mxu0
    %649 = vmatpush.bf16.msra.mxu0 %v513
    %650 = vmatpush.bf16.msra.mxu0 %v512
    %651 = vmatpush.bf16.msra.mxu0 %v511
    %652 = vmatpush.bf16.msra.mxu0 %v510
    %653 = vmatpush.bf16.msra.mxu0 %v509
    %654 = vmatpush.bf16.msra.mxu0 %v508
    %655 = vmatpush.bf16.msra.mxu0 %v507
    %656 = vmatpush.bf16.msra.mxu0 %v506
    %657 = vmatmul.bf16.gmra.mxu0 %v93
    %v658 = vpop.f32.mrf.mxu0
    %v659 = vadd.f32 %v646, %v658
    %v660 = vpop.f32.mrf.mxu0
    %661 = vdwg.mxu0
    %662 = vmatpush.bf16.msra.mxu0 %v521
    %663 = vmatpush.bf16.msra.mxu0 %v520
    %664 = vmatpush.bf16.msra.mxu0 %v519
    %665 = vmatpush.bf16.msra.mxu0 %v518
    %666 = vmatpush.bf16.msra.mxu0 %v517
    %667 = vmatpush.bf16.msra.mxu0 %v516
    %668 = vmatpush.bf16.msra.mxu0 %v515
    %669 = vmatpush.bf16.msra.mxu0 %v514
    %670 = vmatmul.bf16.gmra.mxu0 %v94
    %v671 = vpop.f32.mrf.mxu0
    %v672 = vadd.f32 %v659, %v671
    %v673 = vpop.f32.mrf.mxu0
    %674 = vdwg.mxu0
    %675 = vmatpush.bf16.msra.mxu0 %v529
    %676 = vmatpush.bf16.msra.mxu0 %v528
    %677 = vmatpush.bf16.msra.mxu0 %v527
    %678 = vmatpush.bf16.msra.mxu0 %v526
    %679 = vmatpush.bf16.msra.mxu0 %v525
    %680 = vmatpush.bf16.msra.mxu0 %v524
    %681 = vmatpush.bf16.msra.mxu0 %v523
    %682 = vmatpush.bf16.msra.mxu0 %v522
    %683 = vmatmul.bf16.gmra.mxu0 %v95
    %v684 = vpop.f32.mrf.mxu0
    %v685 = vadd.f32 %v672, %v684
    %v686 = vpop.f32.mrf.mxu0
    %687 = vdwg.mxu0
    %688 = vmatpush.bf16.msra.mxu0 %v537
    %689 = vmatpush.bf16.msra.mxu0 %v536
    %690 = vmatpush.bf16.msra.mxu0 %v535
    %691 = vmatpush.bf16.msra.mxu0 %v534
    %692 = vmatpush.bf16.msra.mxu0 %v533
    %693 = vmatpush.bf16.msra.mxu0 %v532
    %694 = vmatpush.bf16.msra.mxu0 %v531
    %695 = vmatpush.bf16.msra.mxu0 %v530
    %696 = vmatmul.bf16.gmra.mxu0 %v96
    %v697 = vpop.f32.mrf.mxu0
    %v698 = vadd.f32 %v685, %v697
    %v699 = vpop.f32.mrf.mxu0
    %700 = vdwg.mxu0
    %701 = vmatpush.bf16.msra.mxu0 %v545
    %702 = vmatpush.bf16.msra.mxu0 %v544
    %703 = vmatpush.bf16.msra.mxu0 %v543
    %704 = vmatpush.bf16.msra.mxu0 %v542
    %705 = vmatpush.bf16.msra.mxu0 %v541
    %706 = vmatpush.bf16.msra.mxu0 %v540
    %707 = vmatpush.bf16.msra.mxu0 %v539
    %708 = vmatpush.bf16.msra.mxu0 %v538
    %709 = vmatmul.bf16.gmra.mxu0 %v97
    %v710 = vpop.f32.mrf.mxu0
    %v711 = vadd.f32 %v698, %v710
    %v712 = vpop.f32.mrf.mxu0
    %713 = vdwg.mxu0
    %v714 = vadd.f32 %v42, %v711
    %715 = vst [vmem:[#allocation2] sm:$0xff] %v714
    // Predicated region
    $region30: #{simple_nn_forward.1} parent=1 // pred_check
      %p716 = pneg %p37
    $region31: #{simple_nn_forward.1} parent=1 // pred_check_branch
      %718 = sbr.rel (%p716) target = $region33
    $region32: #{simple_nn_forward.1} parent=1 // pred_region
      %v719 = vld [vmem:[#allocation2] sm:$0xff]
      %v720 = vld [vmem:[%s2] sm:$0x1]
      %v722 = vperm.slane %v720, 0
      %v724 = vadd.f32 %v719, %v722
      %v725 = vmax.f32 %v724, 0.0
      %v726 = vpack.c.bf16 %v725, %v725
      %v727 = vld [vmem:[%s3] sm:$0xf]
      %v728 = vld [vmem:[%s3 + $0x4] sm:$0xf]
      %v729 = vld [vmem:[%s3 + $0x8] sm:$0xf]
      %v730 = vld [vmem:[%s3 + $0xc] sm:$0xf]
      %v731 = vld [vmem:[%s3 + $0x10] sm:$0xf]
      %v732 = vld [vmem:[%s3 + $0x14] sm:$0xf]
      %v733 = vld [vmem:[%s3 + $0x18] sm:$0xf]
      %v734 = vld [vmem:[%s3 + $0x1c] sm:$0xf]
      %v735 = vld [vmem:[%s3 + $0x20] sm:$0xf]
      %v736 = vld [vmem:[%s3 + $0x24] sm:$0xf]
      %v737 = vld [vmem:[%s3 + $0x28] sm:$0xf]
      %v738 = vld [vmem:[%s3 + $0x2c] sm:$0xf]
      %v739 = vld [vmem:[%s3 + $0x30] sm:$0xf]
      %v740 = vld [vmem:[%s3 + $0x34] sm:$0xf]
      %v741 = vld [vmem:[%s3 + $0x38] sm:$0xf]
      %v742 = vld [vmem:[%s3 + $0x3c] sm:$0xf]
      %v743 = vld [vmem:[%s4] sm:$0x1]
      %v745 = vperm.slane %v743, 0
      %v763 = vunpack.c.l.b16 %v727
      %v764 = vunpack.c.l.b16 %v728
      %v765 = vunpack.c.l.b16 %v729
      %v766 = vunpack.c.l.b16 %v730
      %v767 = vunpack.c.l.b16 %v731
      %v768 = vunpack.c.l.b16 %v732
      %v769 = vunpack.c.l.b16 %v733
      %v770 = vunpack.c.l.b16 %v734
      %v771 = vunpack.c.l.b16 %v735
      %v772 = vunpack.c.l.b16 %v736
      %v773 = vunpack.c.l.b16 %v737
      %v774 = vunpack.c.l.b16 %v738
      %v775 = vunpack.c.l.b16 %v739
      %v776 = vunpack.c.l.b16 %v740
      %v777 = vunpack.c.l.b16 %v741
      %v778 = vunpack.c.l.b16 %v742
      %v779 = vpack.c.b16 %v764, %v763
      %v780 = vpack.c.b16 %v766, %v765
      %v781 = vpack.c.b16 %v768, %v767
      %v782 = vpack.c.b16 %v770, %v769
      %v783 = vpack.c.b16 %v772, %v771
      %v784 = vpack.c.b16 %v774, %v773
      %v785 = vpack.c.b16 %v776, %v775
      %v786 = vpack.c.b16 %v778, %v777
      %795 = vmatpush.bf16.msra.mxu0 %v786
      %796 = vmatpush.bf16.msra.mxu0 %v785
      %797 = vmatpush.bf16.msra.mxu0 %v784
      %798 = vmatpush.bf16.msra.mxu0 %v783
      %799 = vmatpush.bf16.msra.mxu0 %v782
      %800 = vmatpush.bf16.msra.mxu0 %v781
      %801 = vmatpush.bf16.msra.mxu0 %v780
      %802 = vmatpush.bf16.msra.mxu0 %v779
      %803 = vmatmul.bf16.gmra.mxu0 %v726
      %v804 = vpop.f32.mrf.mxu0
      %v805 = vadd.f32 %v745, %v804
      %v806 = vpop.f32.mrf.mxu0
      %807 = vdwg.mxu0
      %808 = vst [vmem:[#allocation6] sm:$0xff] %v805
    $region33: #{simple_nn_forward.1} parent=1 // pred_fallthru
      _
    // Predicated region
    $region34: #{simple_nn_forward.1} parent=1 // pred_check
      _
    $region35: #{simple_nn_forward.1} parent=1 // pred_check_branch
      %810 = sbr.rel (0) target = $region37
    $region36: #{simple_nn_forward.1} parent=1 // pred_region
      %812 = vsyncadd [#allocation5], 96
      %s813 = sshll.u32 [#allocation6], 4
      %s814 = int_to_ptr.vmem [resolvable:$true] %s813
      %s815 = sshll.u32 %s5, 4
      %s816 = int_to_ptr.hbm [resolvable:$true] %s815
      %821 = dma.vmem_to_hbm [thread:$0]  %s814, 32, %s816, [#allocation5], 32, 32, 2
    $region37: #{simple_nn_forward.1} parent=1 // pred_fallthru
      _
    // Predicated region
    $region38: #{simple_nn_forward.1} parent=1 // pred_check
      _
    $region39: #{simple_nn_forward.1} parent=1 // pred_check_branch
      %823 = sbr.rel (0) target = $region41
    $region40: #{simple_nn_forward.1} parent=1 // pred_region
      %825 = dma.done [#allocation5], 128
    $region41: #{simple_nn_forward.1} parent=1 // pred_fallthru
      _
    %826 = vsyncpa [#allocation4], 1
    %827 = vsyncpa [#allocation5], 1

</llo_original>
